<compile_context>
chip_gen: v7x
topology: tpu7x:2x2x1
jax: 0.10.0
libtpu: 0.0.40
codegen_flags: <defaults>
</compile_context>

<pallas_src>
import functools

import jax
import jax.numpy as jnp
from jax import lax
from jax.experimental import pallas as pl
from jax.experimental.pallas import tpu as pltpu

_NEIGHBOR_OFFSETS = ((-1, -1), (-1, 0), (-1, 1),
                     (0, -1),           (0, 1),
                     (1, -1),  (1, 0),  (1, 1))

# Rough VMEM accounting in units of f32 (TH, Wp) slabs: 2x-buffered inputs
# (C feat + 1 seg) plus ~(3C + 10) live temporaries inside the body.
_VMEM_TARGET_BYTES = 24 * 1024 * 1024     # sizing target for the H tile
_VMEM_LIMIT_BYTES = 48 * 1024 * 1024      # scoped limit (fits v5e/v6e/v7x)


def _sempart_kernel(*refs, C, H, W, TH, Wp, threshold, eps, has_halo,
                    mask_h, mask_w):
    # refs: feat (1,C,TH,Wp), seg (1,1,TH,Wp)
    #       [+ feat top-halo (1,C,8,Wp), seg top-halo (1,1,8,Wp)], out (1,1,8,128)
    if has_halo:
        feat_ref, seg_ref, ftop_ref, stop_ref, out_ref = refs
    else:
        feat_ref, seg_ref, out_ref = refs

    f32 = jnp.float32
    one = f32(1.0)
    zero = f32(0.0)
    half = f32(0.5)
    two = f32(2.0)
    epsv = f32(eps)
    thr = f32(threshold)

    def maskf(cond):
        return jnp.where(cond, one, zero)

    row_off = pl.program_id(1) * TH          # global image row of local row 0

    # ---- load + channel-L2-normalize the centre slab (channels unrolled). ---
    raw = [feat_ref[0, c, :, :].astype(f32) for c in range(C)]
    sumsq = raw[0] * raw[0]
    for c in range(1, C):
        sumsq = sumsq + raw[c] * raw[c]
    inv = lax.rsqrt(jnp.maximum(sumsq, f32(1e-24)))   # == 1/max(||f||, 1e-12)
    fn = [r * inv for r in raw]
    seg = seg_ref[0, 0, :, :].astype(f32)

    # ---- data-independent pair coefficients (reflect padding folded in). ----
    # For e in D4 = {(0,-1),(-1,0),(-1,-1),(-1,+1)} and q = p + e:
    #   c_e(p) = (2^{k_p} + 2^{k_q}) * [q inside the real image]
    # k_p: components of e that reflect off the image border at p,
    # k_q: components of -e that reflect at q.  2^{a+b} = (1+a)(1+b) lets the
    # diagonal maps be built from row (TH,1) x column (1,Wp) factors.
    ry = lax.broadcasted_iota(jnp.int32, (TH, 1), 0) + row_off   # global row
    cx = lax.broadcasted_iota(jnp.int32, (1, Wp), 1)             # column

    yvf = maskf(ry >= 1)           # row y-1 exists
    y1f = maskf(ry == 1)
    yHf = maskf(ry == H - 1)
    xvf = maskf(cx >= 1)           # col x-1 exists
    xrf = maskf(cx <= W - 2)       # col x+1 exists (inside real image)
    x0f = maskf(cx == 0)
    x1f = maskf(cx == 1)
    xW1f = maskf(cx == W - 1)
    xW2f = maskf(cx == W - 2)

    c_01 = (two + x1f + xW1f) * xvf        # e = ( 0,-1)   (1,Wp)
    c_m0 = (two + y1f + yHf) * yvf         # e = (-1, 0)   (TH,1)
    r1 = (one + yHf) * yvf                 # diagonal row factors (TH,1)
    r2 = (one + y1f) * yvf
    k_mm1 = (one + xW1f) * xvf             # e = (-1,-1) col factors (1,Wp)
    k_mm2 = (one + x1f) * xvf
    k_mp1 = (one + x0f) * xrf              # e = (-1,+1) col factors (1,Wp)
    k_mp2 = (one + xW2f) * xrf

    # ---- "row above" neighbour arrays (single up-shift, shared by 3 dirs). --
    if has_halo:
        hraw = [ftop_ref[0, c, 7:8, :].astype(f32) for c in range(C)]
        hss = hraw[0] * hraw[0]
        for c in range(1, C):
            hss = hss + hraw[c] * hraw[c]
        hinv = lax.rsqrt(jnp.maximum(hss, f32(1e-24)))
        hfn = [r * hinv for r in hraw]
        hseg = stop_ref[0, 0, 7:8, :].astype(f32)
        row0 = lax.broadcasted_iota(jnp.int32, (TH, Wp), 0) == 0

        def up(a, fix):
            return jnp.where(row0, fix, pltpu.roll(a, shift=1, axis=0))

        fnu = [up(fn[c], hfn[c]) for c in range(C)]
        segu = up(seg, hseg)
    else:
        # Single H block: local row 0 is image row 0 whose upward coefficients
        # are zero, so the wrapped-around row is never used.
        fnu = [pltpu.roll(f, shift=1, axis=0) for f in fn]
        segu = pltpu.roll(seg, shift=1, axis=0)

    def left(a):       # value of the column-(x-1) neighbour
        return pltpu.roll(a, shift=1, axis=1)

    def right(a):      # value of the column-(x+1) neighbour
        return pltpu.roll(a, shift=Wp - 1, axis=1)

    def term(f_nb, s_nb):
        d = fn[0] - f_nb[0]
        fd = d * d
        for c in range(1, C):
            d = fn[c] - f_nb[c]
            fd = fd + d * d
        sim = one - half * fd                       # 1 - feat_diff/2
        w = jnp.where(sim > thr, one, epsv)
        sd = seg - s_nb
        return w * (sd * sd)

    t = term([left(f) for f in fn], left(seg))               # e = ( 0,-1)
    acc = c_01 * t
    t = term(fnu, segu)                                      # e = (-1, 0)
    acc = acc + c_m0 * t
    t = term([left(f) for f in fnu], left(segu))             # e = (-1,-1)
    acc = acc + r1 * (k_mm1 * t) + r2 * (k_mm2 * t)
    t = term([right(f) for f in fnu], right(segu))           # e = (-1,+1)
    acc = acc + r1 * (k_mp1 * t) + r2 * (k_mp2 * t)

    # Zero the wrapper-padded rows / lanes before reducing.
    if mask_w:
        acc = acc * maskf(cx <= W - 1)
    if mask_h:
        acc = acc * maskf(ry <= H - 1)

    total = jnp.sum(acc)
    out_ref[0, 0, :, :] = jnp.zeros((8, 128), f32) + total


def _pick_block_h(Hp, C, Wp):
    """Largest H tile (multiple of 8, divides Hp) whose live VMEM footprint
    stays under _VMEM_TARGET_BYTES."""
    slabs = 2 * (C + 1) + (3 * C + 10)
    cap_rows = max(8, _VMEM_TARGET_BYTES // (slabs * Wp * 4))
    best = 8
    for t in range(8, Hp + 1, 8):
        if Hp % t == 0 and t <= cap_rows:
            best = t
    return best


def _reference(feat, segment, *, threshold=0.2, eps=1e-6):
    """Plain-JAX mirror of the PyTorch forward (self-check + degenerate path)."""
    feat = feat.astype(jnp.float32)
    segment = segment.astype(jnp.float32)
    norm = jnp.sqrt(jnp.sum(feat * feat, axis=1, keepdims=True))
    feat = feat / jnp.maximum(norm, 1e-12)
    fpad = jnp.pad(feat, ((0, 0), (0, 0), (1, 1), (1, 1)), mode="reflect")
    spad = jnp.pad(segment, ((0, 0), (0, 0), (1, 1), (1, 1)), mode="reflect")
    H, W = feat.shape[2], feat.shape[3]
    fc = fpad[:, :, 1:1 + H, 1:1 + W]
    sc = spad[:, :, 1:1 + H, 1:1 + W]
    terms = []
    for dy, dx in _NEIGHBOR_OFFSETS:
        fnb = fpad[:, :, 1 + dy:1 + dy + H, 1 + dx:1 + dx + W]
        snb = spad[:, :, 1 + dy:1 + dy + H, 1 + dx:1 + dx + W]
        fd = jnp.sum((fc - fnb) ** 2, axis=1)
        w = jnp.where(1.0 - 0.5 * fd > threshold, 1.0, eps)
        sd = jnp.sum((sc - snb) ** 2, axis=1)
        terms.append(w * sd)
    return jnp.mean(jnp.stack(terms, axis=1))


def sempart_feat_reg_loss(feat, segment, *, threshold=0.2, eps=1e-6,
                          block_h=None):
    """feat: (B, C, H, W), segment: (B, 1, H, W) -> scalar loss (f32)."""
    B, C, H, W = feat.shape
    assert segment.shape == (B, 1, H, W), segment.shape

    if H < 2 or W < 2:
        # 'reflect' padding needs >= 2 pixels per spatial dim.
        return _reference(feat, segment, threshold=threshold, eps=eps)

    Hp = -(-H // 8) * 8            # sublane-align rows
    Wp = -(-W // 128) * 128        # lane-align columns (always-aligned rolls)
    if Hp != H or Wp != W:
        pads = ((0, 0), (0, 0), (0, Hp - H), (0, Wp - W))
        feat_p = jnp.pad(feat, pads)
        seg_p = jnp.pad(segment, pads)
    else:
        feat_p, seg_p = feat, segment

    if block_h is not None and int(block_h) % 8 == 0 and Hp % int(block_h) == 0:
        TH = int(block_h)
    else:
        TH = _pick_block_h(Hp, C, Wp)
        if B * (Hp // TH) < 2:
            # v7x has two TensorCores: make sure the grid has >= 2 blocks.
            for t in range(TH - 8, 7, -8):
                if Hp % t == 0:
                    TH = t
                    break
    GH = Hp // TH
    thb = TH // 8
    has_halo = GH > 1

    kernel = functools.partial(
        _sempart_kernel, C=C, H=H, W=W, TH=TH, Wp=Wp,
        threshold=float(threshold), eps=float(eps), has_halo=has_halo,
        mask_h=(Hp != H), mask_w=(Wp != W))

    in_specs = [
        pl.BlockSpec((1, C, TH, Wp), lambda b, i: (b, 0, i, 0)),   # feat slab
        pl.BlockSpec((1, 1, TH, Wp), lambda b, i: (b, 0, i, 0)),   # seg slab
    ]
    operands = [feat_p, seg_p]
    if has_halo:
        halo_map = lambda b, i: (b, 0, jnp.maximum(i * thb - 1, 0), 0)
        in_specs.append(pl.BlockSpec((1, C, 8, Wp), halo_map))     # feat top halo
        in_specs.append(pl.BlockSpec((1, 1, 8, Wp), halo_map))     # seg top halo
        operands.extend([feat_p, seg_p])

    partials = pl.pallas_call(
        kernel,
        grid=(B, GH),
        in_specs=in_specs,
        out_specs=pl.BlockSpec((1, 1, 8, 128), lambda b, i: (b, i, 0, 0)),
        out_shape=jax.ShapeDtypeStruct((B, GH, 8, 128), jnp.float32),
        compiler_params=pltpu.CompilerParams(
            dimension_semantics=("parallel", "parallel"),
            vmem_limit_bytes=_VMEM_LIMIT_BYTES),
    )(*operands)

    return jnp.sum(partials[:, :, 0, 0]) / jnp.float32(B * 8 * H * W)


if __name__ == "__main__":
    key = jax.random.PRNGKey(0)
    k1, k2, k3, k4, k5, k6 = jax.random.split(key, 6)

    # Test 1: module-default channels, single H block (no halo), lane padding.
    B, C, H, W = 2, 3, 16, 16
    feat = jax.random.normal(k1, (B, C, H, W), dtype=jnp.float32)
    seg = jax.random.uniform(k2, (B, 1, H, W), dtype=jnp.float32)
    loss = jax.jit(sempart_feat_reg_loss)(feat, seg)
    jax.block_until_ready(loss)
    ref = _reference(feat, seg)
    assert jnp.allclose(loss, ref, rtol=2e-4, atol=1e-6), (loss, ref)

    # Test 2: H-tiled grid with top-halo rows (GH = 4).
    B2, C2, H2, W2 = 1, 3, 256, 64
    feat2 = jax.random.normal(k3, (B2, C2, H2, W2), dtype=jnp.float32)
    seg2 = jax.random.uniform(k4, (B2, 1, H2, W2), dtype=jnp.float32)
    loss2 = jax.jit(functools.partial(sempart_feat_reg_loss, block_h=64))(
        feat2, seg2)
    jax.block_until_ready(loss2)
    ref2 = _reference(feat2, seg2)
    assert jnp.allclose(loss2, ref2, rtol=2e-4, atol=1e-6), (loss2, ref2)

    # Test 3: non-multiple-of-8 height (row padding) + automatic block split.
    B3, C3, H3, W3 = 1, 3, 20, 24
    feat3 = jax.random.normal(k5, (B3, C3, H3, W3), dtype=jnp.float32)
    seg3 = jax.random.uniform(k6, (B3, 1, H3, W3), dtype=jnp.float32)
    loss3 = jax.jit(sempart_feat_reg_loss)(feat3, seg3)
    jax.block_until_ready(loss3)
    ref3 = _reference(feat3, seg3)
    assert jnp.allclose(loss3, ref3, rtol=2e-4, atol=1e-6), (loss3, ref3)

    print("KERNEL_OK")
</pallas_src>

<mosaic_0001>
module attributes {stable_mosaic.version = 11 : i64} {
  func.func @_sempart_kernel(%arg0: i32, %arg1: i32, %arg2: memref<1x3x16x128xf32, #tpu.memory_space<vmem>>, %arg3: memref<1x1x16x128xf32, #tpu.memory_space<vmem>>, %arg4: memref<1x1x8x128xf32, #tpu.memory_space<vmem>>) attributes {dimension_semantics = [#tpu.dimension_semantics<parallel>, #tpu.dimension_semantics<parallel>], iteration_bounds = array<i64: 2, 1>, scalar_prefetch = 0 : i64, scratch_operands = 0 : i64, tpu.core_type = #tpu.core_type<tc>, window_params = [{transform_indices = @transform_0, window_bounds = array<i64: 1, 3, 16, 128>}, {transform_indices = @transform_1, window_bounds = array<i64: 1, 1, 16, 128>}, {transform_indices = @transform_2, window_bounds = array<i64: 1, 1, 8, 128>}]} {
    %c16_i32 = arith.constant 16 : i32
    %0 = arith.muli %arg1, %c16_i32 : i32
    %c0 = arith.constant 0 : index
    %c0_0 = arith.constant 0 : index
    %c0_1 = arith.constant 0 : index
    %c0_2 = arith.constant 0 : index
    %1 = vector.load %arg2[%c0, %c0_0, %c0_1, %c0_2] : memref<1x3x16x128xf32, #tpu.memory_space<vmem>>, vector<1x1x16x128xf32>
    %2 = vector.shape_cast %1 : vector<1x1x16x128xf32> to vector<16x128xf32>
    %c0_3 = arith.constant 0 : index
    %c1 = arith.constant 1 : index
    %c0_4 = arith.constant 0 : index
    %c0_5 = arith.constant 0 : index
    %3 = vector.load %arg2[%c0_3, %c1, %c0_4, %c0_5] : memref<1x3x16x128xf32, #tpu.memory_space<vmem>>, vector<1x1x16x128xf32>
    %4 = vector.shape_cast %3 : vector<1x1x16x128xf32> to vector<16x128xf32>
    %c0_6 = arith.constant 0 : index
    %c2 = arith.constant 2 : index
    %c0_7 = arith.constant 0 : index
    %c0_8 = arith.constant 0 : index
    %5 = vector.load %arg2[%c0_6, %c2, %c0_7, %c0_8] : memref<1x3x16x128xf32, #tpu.memory_space<vmem>>, vector<1x1x16x128xf32>
    %6 = vector.shape_cast %5 : vector<1x1x16x128xf32> to vector<16x128xf32>
    %7 = arith.mulf %2, %2 : vector<16x128xf32>
    %8 = arith.mulf %4, %4 : vector<16x128xf32>
    %9 = arith.addf %7, %8 : vector<16x128xf32>
    %10 = arith.mulf %6, %6 : vector<16x128xf32>
    %11 = arith.addf %9, %10 : vector<16x128xf32>
    %cst = arith.constant 1.000000e-24 : f32
    %12 = vector.broadcast %cst : f32 to vector<16x128xf32>
    %13 = arith.maximumf %11, %12 : vector<16x128xf32>
    %14 = math.rsqrt %13 : vector<16x128xf32>
    %15 = arith.mulf %2, %14 : vector<16x128xf32>
    %16 = arith.mulf %4, %14 : vector<16x128xf32>
    %17 = arith.mulf %6, %14 : vector<16x128xf32>
    %c0_9 = arith.constant 0 : index
    %c0_10 = arith.constant 0 : index
    %c0_11 = arith.constant 0 : index
    %c0_12 = arith.constant 0 : index
    %18 = vector.load %arg3[%c0_9, %c0_10, %c0_11, %c0_12] : memref<1x1x16x128xf32, #tpu.memory_space<vmem>>, vector<1x1x16x128xf32>
    %19 = vector.shape_cast %18 : vector<1x1x16x128xf32> to vector<16x128xf32>
    %20 = tpu.iota {dimensions = array<i32: 0>} : vector<16x1xi32>
    %21 = vector.broadcast %0 : i32 to vector<16x1xi32>
    %22 = arith.addi %20, %21 : vector<16x1xi32>
    %23 = tpu.iota {dimensions = array<i32: 1>} : vector<1x128xi32>
    %c1_i32 = arith.constant 1 : i32
    %24 = vector.broadcast %c1_i32 : i32 to vector<16x1xi32>
    %25 = arith.cmpi sge, %22, %24 : vector<16x1xi32>
    %cst_13 = arith.constant 1.000000e+00 : f32
    %cst_14 = arith.constant 0.000000e+00 : f32
    %26 = vector.broadcast %cst_13 : f32 to vector<16x1xf32>
    %27 = vector.broadcast %cst_14 : f32 to vector<16x1xf32>
    %28 = arith.select %25, %26, %27 : vector<16x1xi1>, vector<16x1xf32>
    %c1_i32_15 = arith.constant 1 : i32
    %29 = vector.broadcast %c1_i32_15 : i32 to vector<16x1xi32>
    %30 = arith.cmpi eq, %22, %29 : vector<16x1xi32>
    %cst_16 = arith.constant 1.000000e+00 : f32
    %cst_17 = arith.constant 0.000000e+00 : f32
    %31 = vector.broadcast %cst_16 : f32 to vector<16x1xf32>
    %32 = vector.broadcast %cst_17 : f32 to vector<16x1xf32>
    %33 = arith.select %30, %31, %32 : vector<16x1xi1>, vector<16x1xf32>
    %c15_i32 = arith.constant 15 : i32
    %34 = vector.broadcast %c15_i32 : i32 to vector<16x1xi32>
    %35 = arith.cmpi eq, %22, %34 : vector<16x1xi32>
    %cst_18 = arith.constant 1.000000e+00 : f32
    %cst_19 = arith.constant 0.000000e+00 : f32
    %36 = vector.broadcast %cst_18 : f32 to vector<16x1xf32>
    %37 = vector.broadcast %cst_19 : f32 to vector<16x1xf32>
    %38 = arith.select %35, %36, %37 : vector<16x1xi1>, vector<16x1xf32>
    %c1_i32_20 = arith.constant 1 : i32
    %39 = vector.broadcast %c1_i32_20 : i32 to vector<1x128xi32>
    %40 = arith.cmpi sge, %23, %39 : vector<1x128xi32>
    %cst_21 = arith.constant 1.000000e+00 : f32
    %cst_22 = arith.constant 0.000000e+00 : f32
    %41 = vector.broadcast %cst_21 : f32 to vector<1x128xf32>
    %42 = vector.broadcast %cst_22 : f32 to vector<1x128xf32>
    %43 = arith.select %40, %41, %42 : vector<1x128xi1>, vector<1x128xf32>
    %c14_i32 = arith.constant 14 : i32
    %44 = vector.broadcast %c14_i32 : i32 to vector<1x128xi32>
    %45 = arith.cmpi sle, %23, %44 : vector<1x128xi32>
    %cst_23 = arith.constant 1.000000e+00 : f32
    %cst_24 = arith.constant 0.000000e+00 : f32
    %46 = vector.broadcast %cst_23 : f32 to vector<1x128xf32>
    %47 = vector.broadcast %cst_24 : f32 to vector<1x128xf32>
    %48 = arith.select %45, %46, %47 : vector<1x128xi1>, vector<1x128xf32>
    %c0_i32 = arith.constant 0 : i32
    %49 = vector.broadcast %c0_i32 : i32 to vector<1x128xi32>
    %50 = arith.cmpi eq, %23, %49 : vector<1x128xi32>
    %cst_25 = arith.constant 1.000000e+00 : f32
    %cst_26 = arith.constant 0.000000e+00 : f32
    %51 = vector.broadcast %cst_25 : f32 to vector<1x128xf32>
    %52 = vector.broadcast %cst_26 : f32 to vector<1x128xf32>
    %53 = arith.select %50, %51, %52 : vector<1x128xi1>, vector<1x128xf32>
    %c1_i32_27 = arith.constant 1 : i32
    %54 = vector.broadcast %c1_i32_27 : i32 to vector<1x128xi32>
    %55 = arith.cmpi eq, %23, %54 : vector<1x128xi32>
    %cst_28 = arith.constant 1.000000e+00 : f32
    %cst_29 = arith.constant 0.000000e+00 : f32
    %56 = vector.broadcast %cst_28 : f32 to vector<1x128xf32>
    %57 = vector.broadcast %cst_29 : f32 to vector<1x128xf32>
    %58 = arith.select %55, %56, %57 : vector<1x128xi1>, vector<1x128xf32>
    %c15_i32_30 = arith.constant 15 : i32
    %59 = vector.broadcast %c15_i32_30 : i32 to vector<1x128xi32>
    %60 = arith.cmpi eq, %23, %59 : vector<1x128xi32>
    %cst_31 = arith.constant 1.000000e+00 : f32
    %cst_32 = arith.constant 0.000000e+00 : f32
    %61 = vector.broadcast %cst_31 : f32 to vector<1x128xf32>
    %62 = vector.broadcast %cst_32 : f32 to vector<1x128xf32>
    %63 = arith.select %60, %61, %62 : vector<1x128xi1>, vector<1x128xf32>
    %c14_i32_33 = arith.constant 14 : i32
    %64 = vector.broadcast %c14_i32_33 : i32 to vector<1x128xi32>
    %65 = arith.cmpi eq, %23, %64 : vector<1x128xi32>
    %cst_34 = arith.constant 1.000000e+00 : f32
    %cst_35 = arith.constant 0.000000e+00 : f32
    %66 = vector.broadcast %cst_34 : f32 to vector<1x128xf32>
    %67 = vector.broadcast %cst_35 : f32 to vector<1x128xf32>
    %68 = arith.select %65, %66, %67 : vector<1x128xi1>, vector<1x128xf32>
    %cst_36 = arith.constant 2.000000e+00 : f32
    %69 = vector.broadcast %cst_36 : f32 to vector<1x128xf32>
    %70 = arith.addf %69, %58 : vector<1x128xf32>
    %71 = arith.addf %70, %63 : vector<1x128xf32>
    %72 = arith.mulf %71, %43 : vector<1x128xf32>
    %cst_37 = arith.constant 2.000000e+00 : f32
    %73 = vector.broadcast %cst_37 : f32 to vector<16x1xf32>
    %74 = arith.addf %73, %33 : vector<16x1xf32>
    %75 = arith.addf %74, %38 : vector<16x1xf32>
    %76 = arith.mulf %75, %28 : vector<16x1xf32>
    %cst_38 = arith.constant 1.000000e+00 : f32
    %77 = vector.broadcast %cst_38 : f32 to vector<16x1xf32>
    %78 = arith.addf %77, %38 : vector<16x1xf32>
    %79 = arith.mulf %78, %28 : vector<16x1xf32>
    %cst_39 = arith.constant 1.000000e+00 : f32
    %80 = vector.broadcast %cst_39 : f32 to vector<16x1xf32>
    %81 = arith.addf %80, %33 : vector<16x1xf32>
    %82 = arith.mulf %81, %28 : vector<16x1xf32>
    %cst_40 = arith.constant 1.000000e+00 : f32
    %83 = vector.broadcast %cst_40 : f32 to vector<1x128xf32>
    %84 = arith.addf %83, %63 : vector<1x128xf32>
    %85 = arith.mulf %84, %43 : vector<1x128xf32>
    %cst_41 = arith.constant 1.000000e+00 : f32
    %86 = vector.broadcast %cst_41 : f32 to vector<1x128xf32>
    %87 = arith.addf %86, %58 : vector<1x128xf32>
    %88 = arith.mulf %87, %43 : vector<1x128xf32>
    %cst_42 = arith.constant 1.000000e+00 : f32
    %89 = vector.broadcast %cst_42 : f32 to vector<1x128xf32>
    %90 = arith.addf %89, %53 : vector<1x128xf32>
    %91 = arith.mulf %90, %48 : vector<1x128xf32>
    %cst_43 = arith.constant 1.000000e+00 : f32
    %92 = vector.broadcast %cst_43 : f32 to vector<1x128xf32>
    %93 = arith.addf %92, %68 : vector<1x128xf32>
    %94 = arith.mulf %93, %48 : vector<1x128xf32>
    %c1_i32_44 = arith.constant 1 : i32
    %95 = tpu.dynamic_rotate %15 by %c1_i32_44 dim 0 : vector<16x128xf32>, i32 -> vector<16x128xf32>
    %c1_i32_45 = arith.constant 1 : i32
    %96 = tpu.dynamic_rotate %16 by %c1_i32_45 dim 0 : vector<16x128xf32>, i32 -> vector<16x128xf32>
    %c1_i32_46 = arith.constant 1 : i32
    %97 = tpu.dynamic_rotate %17 by %c1_i32_46 dim 0 : vector<16x128xf32>, i32 -> vector<16x128xf32>
    %c1_i32_47 = arith.constant 1 : i32
    %98 = tpu.dynamic_rotate %19 by %c1_i32_47 dim 0 : vector<16x128xf32>, i32 -> vector<16x128xf32>
    %c1_i32_48 = arith.constant 1 : i32
    %99 = tpu.dynamic_rotate %15 by %c1_i32_48 dim 1 : vector<16x128xf32>, i32 -> vector<16x128xf32>
    %c1_i32_49 = arith.constant 1 : i32
    %100 = tpu.dynamic_rotate %16 by %c1_i32_49 dim 1 : vector<16x128xf32>, i32 -> vector<16x128xf32>
    %c1_i32_50 = arith.constant 1 : i32
    %101 = tpu.dynamic_rotate %17 by %c1_i32_50 dim 1 : vector<16x128xf32>, i32 -> vector<16x128xf32>
    %c1_i32_51 = arith.constant 1 : i32
    %102 = tpu.dynamic_rotate %19 by %c1_i32_51 dim 1 : vector<16x128xf32>, i32 -> vector<16x128xf32>
    %103 = arith.subf %15, %99 : vector<16x128xf32>
    %104 = arith.mulf %103, %103 : vector<16x128xf32>
    %105 = arith.subf %16, %100 : vector<16x128xf32>
    %106 = arith.mulf %105, %105 : vector<16x128xf32>
    %107 = arith.addf %104, %106 : vector<16x128xf32>
    %108 = arith.subf %17, %101 : vector<16x128xf32>
    %109 = arith.mulf %108, %108 : vector<16x128xf32>
    %110 = arith.addf %107, %109 : vector<16x128xf32>
    %cst_52 = arith.constant 5.000000e-01 : f32
    %111 = vector.broadcast %cst_52 : f32 to vector<16x128xf32>
    %112 = arith.mulf %111, %110 : vector<16x128xf32>
    %cst_53 = arith.constant 1.000000e+00 : f32
    %113 = vector.broadcast %cst_53 : f32 to vector<16x128xf32>
    %114 = arith.subf %113, %112 : vector<16x128xf32>
    %cst_54 = arith.constant 2.000000e-01 : f32
    %115 = vector.broadcast %cst_54 : f32 to vector<16x128xf32>
    %116 = arith.cmpf ogt, %114, %115 : vector<16x128xf32>
    %cst_55 = arith.constant 1.000000e+00 : f32
    %cst_56 = arith.constant 9.99999997E-7 : f32
    %117 = vector.broadcast %cst_55 : f32 to vector<16x128xf32>
    %118 = vector.broadcast %cst_56 : f32 to vector<16x128xf32>
    %119 = arith.select %116, %117, %118 : vector<16x128xi1>, vector<16x128xf32>
    %120 = arith.subf %19, %102 : vector<16x128xf32>
    %121 = arith.mulf %120, %120 : vector<16x128xf32>
    %122 = arith.mulf %119, %121 : vector<16x128xf32>
    %123 = vector.broadcast %72 : vector<1x128xf32> to vector<16x128xf32>
    %124 = arith.mulf %123, %122 : vector<16x128xf32>
    %125 = arith.subf %15, %95 : vector<16x128xf32>
    %126 = arith.mulf %125, %125 : vector<16x128xf32>
    %127 = arith.subf %16, %96 : vector<16x128xf32>
    %128 = arith.mulf %127, %127 : vector<16x128xf32>
    %129 = arith.addf %126, %128 : vector<16x128xf32>
    %130 = arith.subf %17, %97 : vector<16x128xf32>
    %131 = arith.mulf %130, %130 : vector<16x128xf32>
    %132 = arith.addf %129, %131 : vector<16x128xf32>
    %cst_57 = arith.constant 5.000000e-01 : f32
    %133 = vector.broadcast %cst_57 : f32 to vector<16x128xf32>
    %134 = arith.mulf %133, %132 : vector<16x128xf32>
    %cst_58 = arith.constant 1.000000e+00 : f32
    %135 = vector.broadcast %cst_58 : f32 to vector<16x128xf32>
    %136 = arith.subf %135, %134 : vector<16x128xf32>
    %cst_59 = arith.constant 2.000000e-01 : f32
    %137 = vector.broadcast %cst_59 : f32 to vector<16x128xf32>
    %138 = arith.cmpf ogt, %136, %137 : vector<16x128xf32>
    %cst_60 = arith.constant 1.000000e+00 : f32
    %cst_61 = arith.constant 9.99999997E-7 : f32
    %139 = vector.broadcast %cst_60 : f32 to vector<16x128xf32>
    %140 = vector.broadcast %cst_61 : f32 to vector<16x128xf32>
    %141 = arith.select %138, %139, %140 : vector<16x128xi1>, vector<16x128xf32>
    %142 = arith.subf %19, %98 : vector<16x128xf32>
    %143 = arith.mulf %142, %142 : vector<16x128xf32>
    %144 = arith.mulf %141, %143 : vector<16x128xf32>
    %145 = vector.broadcast %76 : vector<16x1xf32> to vector<16x128xf32>
    %146 = arith.mulf %145, %144 : vector<16x128xf32>
    %147 = arith.addf %124, %146 : vector<16x128xf32>
    %c1_i32_62 = arith.constant 1 : i32
    %148 = tpu.dynamic_rotate %95 by %c1_i32_62 dim 1 : vector<16x128xf32>, i32 -> vector<16x128xf32>
    %c1_i32_63 = arith.constant 1 : i32
    %149 = tpu.dynamic_rotate %96 by %c1_i32_63 dim 1 : vector<16x128xf32>, i32 -> vector<16x128xf32>
    %c1_i32_64 = arith.constant 1 : i32
    %150 = tpu.dynamic_rotate %97 by %c1_i32_64 dim 1 : vector<16x128xf32>, i32 -> vector<16x128xf32>
    %c1_i32_65 = arith.constant 1 : i32
    %151 = tpu.dynamic_rotate %98 by %c1_i32_65 dim 1 : vector<16x128xf32>, i32 -> vector<16x128xf32>
    %152 = arith.subf %15, %148 : vector<16x128xf32>
    %153 = arith.mulf %152, %152 : vector<16x128xf32>
    %154 = arith.subf %16, %149 : vector<16x128xf32>
    %155 = arith.mulf %154, %154 : vector<16x128xf32>
    %156 = arith.addf %153, %155 : vector<16x128xf32>
    %157 = arith.subf %17, %150 : vector<16x128xf32>
    %158 = arith.mulf %157, %157 : vector<16x128xf32>
    %159 = arith.addf %156, %158 : vector<16x128xf32>
    %cst_66 = arith.constant 5.000000e-01 : f32
    %160 = vector.broadcast %cst_66 : f32 to vector<16x128xf32>
    %161 = arith.mulf %160, %159 : vector<16x128xf32>
    %cst_67 = arith.constant 1.000000e+00 : f32
    %162 = vector.broadcast %cst_67 : f32 to vector<16x128xf32>
    %163 = arith.subf %162, %161 : vector<16x128xf32>
    %cst_68 = arith.constant 2.000000e-01 : f32
    %164 = vector.broadcast %cst_68 : f32 to vector<16x128xf32>
    %165 = arith.cmpf ogt, %163, %164 : vector<16x128xf32>
    %cst_69 = arith.constant 1.000000e+00 : f32
    %cst_70 = arith.constant 9.99999997E-7 : f32
    %166 = vector.broadcast %cst_69 : f32 to vector<16x128xf32>
    %167 = vector.broadcast %cst_70 : f32 to vector<16x128xf32>
    %168 = arith.select %165, %166, %167 : vector<16x128xi1>, vector<16x128xf32>
    %169 = arith.subf %19, %151 : vector<16x128xf32>
    %170 = arith.mulf %169, %169 : vector<16x128xf32>
    %171 = arith.mulf %168, %170 : vector<16x128xf32>
    %172 = vector.broadcast %85 : vector<1x128xf32> to vector<16x128xf32>
    %173 = arith.mulf %172, %171 : vector<16x128xf32>
    %174 = vector.broadcast %79 : vector<16x1xf32> to vector<16x128xf32>
    %175 = arith.mulf %174, %173 : vector<16x128xf32>
    %176 = arith.addf %147, %175 : vector<16x128xf32>
    %177 = vector.broadcast %88 : vector<1x128xf32> to vector<16x128xf32>
    %178 = arith.mulf %177, %171 : vector<16x128xf32>
    %179 = vector.broadcast %82 : vector<16x1xf32> to vector<16x128xf32>
    %180 = arith.mulf %179, %178 : vector<16x128xf32>
    %181 = arith.addf %176, %180 : vector<16x128xf32>
    %c127_i32 = arith.constant 127 : i32
    %182 = tpu.dynamic_rotate %95 by %c127_i32 dim 1 : vector<16x128xf32>, i32 -> vector<16x128xf32>
    %c127_i32_71 = arith.constant 127 : i32
    %183 = tpu.dynamic_rotate %96 by %c127_i32_71 dim 1 : vector<16x128xf32>, i32 -> vector<16x128xf32>
    %c127_i32_72 = arith.constant 127 : i32
    %184 = tpu.dynamic_rotate %97 by %c127_i32_72 dim 1 : vector<16x128xf32>, i32 -> vector<16x128xf32>
    %c127_i32_73 = arith.constant 127 : i32
    %185 = tpu.dynamic_rotate %98 by %c127_i32_73 dim 1 : vector<16x128xf32>, i32 -> vector<16x128xf32>
    %186 = arith.subf %15, %182 : vector<16x128xf32>
    %187 = arith.mulf %186, %186 : vector<16x128xf32>
    %188 = arith.subf %16, %183 : vector<16x128xf32>
    %189 = arith.mulf %188, %188 : vector<16x128xf32>
    %190 = arith.addf %187, %189 : vector<16x128xf32>
    %191 = arith.subf %17, %184 : vector<16x128xf32>
    %192 = arith.mulf %191, %191 : vector<16x128xf32>
    %193 = arith.addf %190, %192 : vector<16x128xf32>
    %cst_74 = arith.constant 5.000000e-01 : f32
    %194 = vector.broadcast %cst_74 : f32 to vector<16x128xf32>
    %195 = arith.mulf %194, %193 : vector<16x128xf32>
    %cst_75 = arith.constant 1.000000e+00 : f32
    %196 = vector.broadcast %cst_75 : f32 to vector<16x128xf32>
    %197 = arith.subf %196, %195 : vector<16x128xf32>
    %cst_76 = arith.constant 2.000000e-01 : f32
    %198 = vector.broadcast %cst_76 : f32 to vector<16x128xf32>
    %199 = arith.cmpf ogt, %197, %198 : vector<16x128xf32>
    %cst_77 = arith.constant 1.000000e+00 : f32
    %cst_78 = arith.constant 9.99999997E-7 : f32
    %200 = vector.broadcast %cst_77 : f32 to vector<16x128xf32>
    %201 = vector.broadcast %cst_78 : f32 to vector<16x128xf32>
    %202 = arith.select %199, %200, %201 : vector<16x128xi1>, vector<16x128xf32>
    %203 = arith.subf %19, %185 : vector<16x128xf32>
    %204 = arith.mulf %203, %203 : vector<16x128xf32>
    %205 = arith.mulf %202, %204 : vector<16x128xf32>
    %206 = vector.broadcast %91 : vector<1x128xf32> to vector<16x128xf32>
    %207 = arith.mulf %206, %205 : vector<16x128xf32>
    %208 = vector.broadcast %79 : vector<16x1xf32> to vector<16x128xf32>
    %209 = arith.mulf %208, %207 : vector<16x128xf32>
    %210 = arith.addf %181, %209 : vector<16x128xf32>
    %211 = vector.broadcast %94 : vector<1x128xf32> to vector<16x128xf32>
    %212 = arith.mulf %211, %205 : vector<16x128xf32>
    %213 = vector.broadcast %82 : vector<16x1xf32> to vector<16x128xf32>
    %214 = arith.mulf %213, %212 : vector<16x128xf32>
    %215 = arith.addf %210, %214 : vector<16x128xf32>
    %c15_i32_79 = arith.constant 15 : i32
    %216 = vector.broadcast %c15_i32_79 : i32 to vector<1x128xi32>
    %217 = arith.cmpi sle, %23, %216 : vector<1x128xi32>
    %cst_80 = arith.constant 1.000000e+00 : f32
    %cst_81 = arith.constant 0.000000e+00 : f32
    %218 = vector.broadcast %cst_80 : f32 to vector<1x128xf32>
    %219 = vector.broadcast %cst_81 : f32 to vector<1x128xf32>
    %220 = arith.select %217, %218, %219 : vector<1x128xi1>, vector<1x128xf32>
    %221 = vector.broadcast %220 : vector<1x128xf32> to vector<16x128xf32>
    %222 = arith.mulf %215, %221 : vector<16x128xf32>
    %223 = vector.shape_cast %222 : vector<16x128xf32> to vector<1x16x128xf32>
    %cst_82 = arith.constant dense<0.000000e+00> : vector<1xf32>
    %224 = vector.multi_reduction <add>, %223, %cst_82 [1, 2] : vector<1x16x128xf32> to vector<1xf32>
    %225 = vector.shape_cast %224 : vector<1xf32> to vector<1x1x1xf32>
    %226 = vector.extract %225[0, 0, 0] : f32 from vector<1x1x1xf32>
    %cst_83 = arith.constant 0.000000e+00 : f32
    %227 = vector.broadcast %cst_83 : f32 to vector<8x128xf32>
    %228 = vector.broadcast %226 : f32 to vector<8x128xf32>
    %229 = arith.addf %227, %228 : vector<8x128xf32>
    %c0_84 = arith.constant 0 : index
    %c0_85 = arith.constant 0 : index
    %c0_86 = arith.constant 0 : index
    %c0_87 = arith.constant 0 : index
    %230 = vector.load %arg4[%c0_84, %c0_85, %c0_86, %c0_87] : memref<1x1x8x128xf32, #tpu.memory_space<vmem>>, vector<1x1x8x128xf32>
    %231 = vector.shape_cast %230 : vector<1x1x8x128xf32> to vector<8x128xf32>
    %232 = vector.shape_cast %229 : vector<8x128xf32> to vector<1x1x8x128xf32>
    tpu.vector_store %arg4[%c0_84, %c0_85, %c0_86, %c0_87], %232 {strides = array<i32>} : memref<1x1x8x128xf32, #tpu.memory_space<vmem>>, vector<1x1x8x128xf32>,
    return
  }
  func.func @transform_0(%arg0: i32, %arg1: i32) -> (i32, i32, i32, i32) {
    %c0_i32 = arith.constant 0 : i32
    %c0_i32_0 = arith.constant 0 : i32
    %c0_i32_1 = arith.constant 0 : i32
    return %arg0, %c0_i32, %arg1, %c0_i32_0 : i32, i32, i32, i32
  }
  func.func @transform_1(%arg0: i32, %arg1: i32) -> (i32, i32, i32, i32) {
    %c0_i32 = arith.constant 0 : i32
    %c0_i32_0 = arith.constant 0 : i32
    %c0_i32_1 = arith.constant 0 : i32
    return %arg0, %c0_i32, %arg1, %c0_i32_0 : i32, i32, i32, i32
  }
  func.func @transform_2(%arg0: i32, %arg1: i32) -> (i32, i32, i32, i32) {
    %c0_i32 = arith.constant 0 : i32
    %c0_i32_0 = arith.constant 0 : i32
    %c0_i32_1 = arith.constant 0 : i32
    return %arg0, %arg1, %c0_i32, %c0_i32_0 : i32, i32, i32, i32
  }
}

</mosaic_0001>

<llo_original>
// kernel: sempart_feat_reg_loss.1
$region0: #{sempart_feat_reg_loss.1}
  #allocation0 [shape = 'u32[]', space=smem, size = 0x4, offset = 0x4, fixed_abs, tag = 'smem constant byte address 0x4 - core index']
  #allocation1 [shape = 'u32[144,128]{1,0:T(1,128)}', space=vmem, size = 0x12000, scoped, tag = 'internal scratch']
  %s0 = inlined_call_operand.vmem [shape: f32[2,3,16,128], index: 0, kind: input, shape index: {}]
  %s1 = inlined_call_operand.vmem [shape: f32[2,1,16,128], index: 1, kind: input, shape index: {}]
  %s2 = inlined_call_operand.vmem [shape: f32[2,1,8,128], index: 2, kind: output, shape index: {}]
  %s3 = sld [smem:[#allocation0]]
  $region41: #{sempart_feat_reg_loss.1} parent=0
    _
  %s5 = ssub.s32 1, %s3
  %s6 = scalar_select 0, %s5, %s3
  loop: start=0, step=1, limit=4
  $region2: #{sempart_feat_reg_loss.1} parent=0 // loop_pre_header
    _
  $region3: #{sempart_feat_reg_loss.1} parent=0 // loop_header
    %s8 = sphi 0, %s12
    %p9 = scmp.ge.s32.totalorder %s8, 4
    %s15 = sphi 0, %s27
    %s16 = sphi 0, %s23
    %s17 = sphi 0, %s15
    %s18 = sphi 0, %s16
    %s19 = sphi 0, %s17
    %s20 = sphi 0, %s18
    %s32 = sphi 0, %s34
    %s35 = sphi 0, %s32
    %s36 = sphi 0, %s35
    %s52 = sphi 0, %s36
    %s60 = sphi 0, %s62
    %s63 = sphi 0, %s60
    %s64 = sphi 0, %s63
    %s80 = sphi 0, %s64
    %s88 = sphi 0, %s90
    %s91 = sphi 0, %s88
    %s92 = sphi 0, %s91
    %s108 = sphi 0, %s92
  $region4: #{sempart_feat_reg_loss.1} parent=0 // loop_header_branch
    %11 = sbr.rel (%p9) target = $region8
  $region5: #{sempart_feat_reg_loss.1} parent=0 // loop_body
    %s13 = ssub.s32 %s8, 1
    %s14 = ssub.s32 %s8, 2
    %s21 = sadd.s32 1, %s16
    %p22 = scmp.ge.s32.totalorder %s21, 1
    %s23 = scalar_select %p22, 0, %s21
    %s24 = sadd.s32 1, %s15
    %s25 = scalar_select %p22, %s24, %s15
    %p26 = scmp.ge.s32.totalorder %s25, 2
    %s27 = scalar_select %p26, 0, %s25
    %s28 = ssub.s32 %s15, %s27
    %s29 = ssub.s32 %s16, %s23
    %s30 = sor.u32 %s28, %s29
    %p31 = scmp.eq.s32.totalorder %s30, 0
    %s33 = sadd.s32 %s32, 1
    %s34 = scalar_select %p31, %s32, %s33
    %p37 = pneg %p31
    %p38 = scmp.eq.s32.totalorder %s8, 1
    %p39 = por %p37, %p38
    %p40 = scmp.ne.s32.totalorder %s32, %s35
    %p41 = scmp.eq.s32.totalorder %s8, 0
    %p42 = por %p40, %p41
    %p43 = scmp.ne.s32.totalorder %s32, %s35
    %p44 = scmp.eq.s32.totalorder %s13, 1
    %p45 = por %p43, %p44
    %p46 = scmp.ne.s32.totalorder %s35, %s36
    %p47 = scmp.eq.s32.totalorder %s13, 0
    %p48 = por %p46, %p47
    %p49 = scmp.ne.s32.totalorder %s35, %s36
    %p50 = scmp.eq.s32.totalorder %s14, 1
    %p51 = por %p49, %p50
    %p53 = scmp.ne.s32.totalorder %s36, %s52
    %p54 = scmp.eq.s32.totalorder %s14, 0
    %p55 = por %p53, %p54
    %s56 = ssub.s32 %s15, %s27
    %s57 = ssub.s32 %s16, %s23
    %s58 = sor.u32 %s56, %s57
    %p59 = scmp.eq.s32.totalorder %s58, 0
    %s61 = sadd.s32 %s60, 1
    %s62 = scalar_select %p59, %s60, %s61
    %p65 = pneg %p59
    %p66 = scmp.eq.s32.totalorder %s8, 1
    %p67 = por %p65, %p66
    %p68 = scmp.ne.s32.totalorder %s60, %s63
    %p69 = scmp.eq.s32.totalorder %s8, 0
    %p70 = por %p68, %p69
    %p71 = scmp.ne.s32.totalorder %s60, %s63
    %p72 = scmp.eq.s32.totalorder %s13, 1
    %p73 = por %p71, %p72
    %p74 = scmp.ne.s32.totalorder %s63, %s64
    %p75 = scmp.eq.s32.totalorder %s13, 0
    %p76 = por %p74, %p75
    %p77 = scmp.ne.s32.totalorder %s63, %s64
    %p78 = scmp.eq.s32.totalorder %s14, 1
    %p79 = por %p77, %p78
    %p81 = scmp.ne.s32.totalorder %s64, %s80
    %p82 = scmp.eq.s32.totalorder %s14, 0
    %p83 = por %p81, %p82
    %s84 = ssub.s32 %s15, %s27
    %s85 = ssub.s32 %s16, %s23
    %s86 = sor.u32 %s84, %s85
    %p87 = scmp.eq.s32.totalorder %s86, 0
    %s89 = sadd.s32 %s88, 1
    %s90 = scalar_select %p87, %s88, %s89
    %p93 = pneg %p87
    %p94 = scmp.eq.s32.totalorder %s8, 1
    %p95 = por %p93, %p94
    %p96 = scmp.ne.s32.totalorder %s88, %s91
    %p97 = scmp.eq.s32.totalorder %s8, 0
    %p98 = por %p96, %p97
    %p99 = scmp.ne.s32.totalorder %s88, %s91
    %p100 = scmp.eq.s32.totalorder %s13, 1
    %p101 = por %p99, %p100
    %p102 = scmp.ne.s32.totalorder %s91, %s92
    %p103 = scmp.eq.s32.totalorder %s13, 0
    %p104 = por %p102, %p103
    %p105 = scmp.ne.s32.totalorder %s91, %s92
    %p106 = scmp.eq.s32.totalorder %s14, 1
    %p107 = por %p105, %p106
    %p109 = scmp.ne.s32.totalorder %s92, %s108
    %p110 = scmp.eq.s32.totalorder %s14, 0
    %p111 = por %p109, %p110
    %p112 = scmp.le.s32.totalorder 1, %s8
    %p113 = scmp.lt.s32.totalorder %s8, 3
    %p114 = pnand %p112, %p113
    %p115 = pneg %p114
    // Predicated region
    $region9: #{sempart_feat_reg_loss.1} parent=5 // pred_check
      _
    $region10: #{sempart_feat_reg_loss.1} parent=5 // pred_check_branch
      %117 = sbr.rel (%p114) target = $region12
    $region11: #{sempart_feat_reg_loss.1} parent=5 // pred_region
      %s118 = ssub.s32 %s8, 1
    $region12: #{sempart_feat_reg_loss.1} parent=5 // pred_fallthru
      _
    %p119 = scmp.lt.s32.totalorder %s8, 2
    // Predicated region
    $region13: #{sempart_feat_reg_loss.1} parent=5 // pred_check
      %p120 = pneg %p119
    $region14: #{sempart_feat_reg_loss.1} parent=5 // pred_check_branch
      %122 = sbr.rel (%p120) target = $region16
    $region15: #{sempart_feat_reg_loss.1} parent=5 // pred_region
      // Predicated region
      $region17: #{sempart_feat_reg_loss.1} parent=15 // pred_check
        %p123 = pneg %p42
      $region18: #{sempart_feat_reg_loss.1} parent=15 // pred_check_branch
        %125 = sbr.rel (%p123) target = $region20
      $region19: #{sempart_feat_reg_loss.1} parent=15 // pred_region
        %s126 = smul.u32 2, %s16
        %p127 = scmp.lt.s32.totalorder %s15, 1
        %s128 = scalar_select %p127, %s15, 1
        %p129 = scmp.lt.s32.totalorder %s126, 1
        %s130 = scalar_select %p129, %s126, 1
        %s131 = smul.addr %s128, 6
        %s132 = sadd.s32 %s130, %s131
        %s133 = smul.addr %s132, 8
        %s134 = scalar_lea.vmem %s0, %s133
        %s135 = smul.u32 2, %s16
      $region20: #{sempart_feat_reg_loss.1} parent=15 // pred_fallthru
        _
      // Predicated region
      $region21: #{sempart_feat_reg_loss.1} parent=15 // pred_check
        %p136 = pneg %p70
      $region22: #{sempart_feat_reg_loss.1} parent=15 // pred_check_branch
        %138 = sbr.rel (%p136) target = $region24
      $region23: #{sempart_feat_reg_loss.1} parent=15 // pred_region
        %s139 = smul.u32 2, %s16
        %p140 = scmp.lt.s32.totalorder %s15, 1
        %s141 = scalar_select %p140, %s15, 1
        %p142 = scmp.lt.s32.totalorder %s139, 1
        %s143 = scalar_select %p142, %s139, 1
        %s144 = smul.addr %s141, 2
        %s145 = sadd.s32 %s143, %s144
        %s146 = smul.addr %s145, 8
        %s147 = scalar_lea.vmem %s1, %s146
        %s148 = smul.u32 2, %s16
      $region24: #{sempart_feat_reg_loss.1} parent=15 // pred_fallthru
        _
    $region16: #{sempart_feat_reg_loss.1} parent=5 // pred_fallthru
      _
    %p149 = scmp.le.s32.totalorder 1, %s8
    %p150 = scmp.lt.s32.totalorder %s8, 3
    %p151 = pnand %p149, %p150
    %p152 = pneg %p151
    // Predicated region
    $region25: #{sempart_feat_reg_loss.1} parent=5 // pred_check
      _
    $region26: #{sempart_feat_reg_loss.1} parent=5 // pred_check_branch
      %154 = sbr.rel (%p151) target = $region28
    $region27: #{sempart_feat_reg_loss.1} parent=5 // pred_region
      %s155 = ssub.s32 %s8, 1
      %s156 = smul.u32 2, %s18
      %p157 = scmp.lt.s32.totalorder %s17, 1
      %s158 = scalar_select %p157, %s17, 1
      %p159 = scmp.lt.s32.totalorder %s156, 1
      %s160 = scalar_select %p159, %s156, 1
      %s161 = smul.addr %s158, 6
      %s162 = sadd.s32 %s160, %s161
      %s163 = smul.addr %s162, 8
      %s164 = scalar_lea.vmem %s0, %s163
      %p165 = pneg %p48
      %p166 = pneg %p45
      %s167 = smul.u32 2, %s18
      %p168 = scmp.lt.s32.totalorder %s17, 1
      %s169 = scalar_select %p168, %s17, 1
      %p170 = scmp.lt.s32.totalorder %s167, 1
      %s171 = scalar_select %p170, %s167, 1
      %s172 = smul.addr %s169, 2
      %s173 = sadd.s32 %s171, %s172
      %s174 = smul.addr %s173, 8
      %s175 = scalar_lea.vmem %s1, %s174
      %p176 = pneg %p76
      %p177 = pneg %p73
      %p178 = pneg %p104
      %p179 = pneg %p101
      %p180 = scmp.lt.s32.totalorder %s17, 1
      %s181 = scalar_select %p180, %s17, 1
      %p182 = scmp.lt.s32.totalorder %s18, 0
      %s183 = scalar_select %p182, %s18, 0
      %s184 = sadd.s32 %s183, %s181
      %s185 = smul.addr %s184, 8
      %s186 = scalar_lea.vmem %s2, %s185
      %s187 = smul.u32 2, %s18
      %p188 = scmp.lt.s32.totalorder %s17, 1
      %s189 = scalar_select %p188, %s17, 1
      %p190 = scmp.lt.s32.totalorder %s187, 1
      %s191 = scalar_select %p190, %s187, 1
      %s192 = smul.addr %s189, 6
      %s193 = sadd.s32 %s191, %s192
      %s194 = smul.addr %s193, 8
      %s195 = scalar_lea.vmem %s0, %s194
      %s196 = smul.u32 2, %s18
      %s197 = smul.u32 2, %s18
      %p198 = scmp.lt.s32.totalorder %s17, 1
      %s199 = scalar_select %p198, %s17, 1
      %p200 = scmp.lt.s32.totalorder %s197, 1
      %s201 = scalar_select %p200, %s197, 1
      %s202 = smul.addr %s199, 2
      %s203 = sadd.s32 %s201, %s202
      %s204 = smul.addr %s203, 8
      %s205 = scalar_lea.vmem %s1, %s204
      %s206 = smul.u32 2, %s18
      %p207 = scmp.lt.s32.totalorder %s17, 1
      %s208 = scalar_select %p207, %s17, 1
      %p209 = scmp.lt.s32.totalorder %s18, 0
      %s210 = scalar_select %p209, %s18, 0
      %s211 = sadd.s32 %s210, %s208
      %s212 = smul.addr %s211, 8
      %s213 = scalar_lea.vmem %s2, %s212
      %s214 = smul.u32 %s18, 16
      %v215 = vld [vmem:[%s195] sm:$0xff]
      %v216 = vld [vmem:[%s195 + $0x8] sm:$0xff]
      %s217 = scalar_lea.vmem %s195, 16
      %v218 = vld [vmem:[%s217] sm:$0xff]
      %v219 = vld [vmem:[%s217 + $0x8] sm:$0xff]
      %s220 = scalar_lea.vmem %s195, 32
      %v221 = vld [vmem:[%s220] sm:$0xff]
      %v222 = vld [vmem:[%s220 + $0x8] sm:$0xff]
      %v223 = vmul.f32 %v215, %v215
      %v224 = vmul.f32 %v216, %v216
      %v225 = vmul.f32 %v218, %v218
      %v226 = vmul.f32 %v219, %v219
      %v227 = vadd.f32 %v223, %v225
      %v228 = vadd.f32 %v224, %v226
      %v229 = vmul.f32 %v221, %v221
      %v230 = vmul.f32 %v222, %v222
      %v231 = vadd.f32 %v227, %v229
      %v232 = vadd.f32 %v228, %v230
      %v233 = vmax.f32 %v231, 1e-24
      %v234 = vmax.f32 %v232, 1e-24
      %v235 = vrsqrt.pop %v233
      %v236 = vrsqrt.pop %v234
      %v237 = vmul.f32 %v215, %v235
      %v238 = vmul.f32 %v216, %v236
      %v239 = vmul.f32 %v218, %v235
      %v240 = vmul.f32 %v219, %v236
      %v241 = vmul.f32 %v221, %v235
      %v242 = vmul.f32 %v222, %v236
      %v243 = vld [vmem:[%s205] sm:$0xff]
      %v244 = vld [vmem:[%s205 + $0x8] sm:$0xff]
      %v245 = vlaneseq
      %v246 = vshrl.u32 %v245, 7
      %v247 = vadd.s32 %v246, 8
      %v248 = vstv %s214
      %v249 = vadd.s32 %v246, %v248
      %v250 = vadd.s32 %v247, %v248
      %v251 = vlaneseq
      %v252 = vand.u32 %v251, 127
      %vm253 = vcmp.ge.s32.totalorder %v249, 1
      %vm254 = vcmp.ge.s32.totalorder %v250, 1
      %v255 = vsel %vm253, 1.0, 0.0
      %v256 = vsel %vm254, 1.0, 0.0
      %vm257 = vcmp.eq.s32.totalorder %v249, 1
      %vm258 = vcmp.eq.s32.totalorder %v250, 1
      %v259 = vsel %vm257, 1.0, 0.0
      %v260 = vsel %vm258, 1.0, 0.0
      %vm261 = vcmp.eq.s32.totalorder %v249, 15
      %vm262 = vcmp.eq.s32.totalorder %v250, 15
      %v263 = vsel %vm261, 1.0, 0.0
      %v264 = vsel %vm262, 1.0, 0.0
      %vm265 = vcmp.ge.s32.totalorder %v252, 1
      %v266 = vsel %vm265, 1.0, 0.0
      %vm267 = vcmp.le.s32.totalorder %v252, 14
      %v268 = vsel %vm267, 1.0, 0.0
      %vm269 = vcmp.eq.s32.totalorder %v252, 0
      %v270 = vsel %vm269, 1.0, 0.0
      %vm271 = vcmp.eq.s32.totalorder %v252, 1
      %v272 = vsel %vm271, 1.0, 0.0
      %vm273 = vcmp.eq.s32.totalorder %v252, 15
      %v274 = vsel %vm273, 1.0, 0.0
      %vm275 = vcmp.eq.s32.totalorder %v252, 14
      %v276 = vsel %vm275, 1.0, 0.0
      %v277 = vadd.f32 %v272, 2.0
      %v278 = vadd.f32 %v277, %v274
      %v279 = vmul.f32 %v278, %v266
      %v280 = vadd.f32 %v259, 2.0
      %v281 = vadd.f32 %v260, 2.0
      %v282 = vadd.f32 %v280, %v263
      %v283 = vadd.f32 %v281, %v264
      %v284 = vmul.f32 %v282, %v255
      %v285 = vmul.f32 %v283, %v256
      %v286 = vadd.f32 %v263, 1.0
      %v287 = vadd.f32 %v264, 1.0
      %v288 = vmul.f32 %v286, %v255
      %v289 = vmul.f32 %v287, %v256
      %v290 = vadd.f32 %v259, 1.0
      %v291 = vadd.f32 %v260, 1.0
      %v292 = vmul.f32 %v290, %v255
      %v293 = vmul.f32 %v291, %v256
      %v294 = vadd.f32 %v274, 1.0
      %v295 = vmul.f32 %v294, %v266
      %v296 = vadd.f32 %v272, 1.0
      %v297 = vmul.f32 %v296, %v266
      %v298 = vadd.f32 %v270, 1.0
      %v299 = vmul.f32 %v298, %v268
      %v300 = vadd.f32 %v276, 1.0
      %v301 = vmul.f32 %v300, %v268
      %v302 = vrot.slane %v237, 7
      %v303 = vrot.slane %v238, 7
      %vm304 = vcmp.lt.s32.totalorder %v246, 1
      %v305 = vsel %vm304, %v302, %v303
      %v306 = vsel %vm304, %v303, %v302
      %v307 = vrot.slane %v239, 7
      %v308 = vrot.slane %v240, 7
      %v309 = vsel %vm304, %v307, %v308
      %v310 = vsel %vm304, %v308, %v307
      %v311 = vrot.slane %v241, 7
      %v312 = vrot.slane %v242, 7
      %v313 = vsel %vm304, %v311, %v312
      %v314 = vsel %vm304, %v312, %v311
      %v315 = vrot.slane %v243, 7
      %v316 = vrot.slane %v244, 7
      %v317 = vsel %vm304, %v315, %v316
      %v318 = vsel %vm304, %v316, %v315
      %319 = vrot.lane.b32.xlu0 %v237, 1
      %v320 = vpop.permute.xlu0 %319
      %321 = vrot.lane.b32.xlu0 %v238, 1
      %v322 = vpop.permute.xlu0 %321
      %323 = vrot.lane.b32.xlu0 %v239, 1
      %v324 = vpop.permute.xlu0 %323
      %325 = vrot.lane.b32.xlu0 %v240, 1
      %v326 = vpop.permute.xlu0 %325
      %327 = vrot.lane.b32.xlu0 %v241, 1
      %v328 = vpop.permute.xlu0 %327
      %329 = vrot.lane.b32.xlu0 %v242, 1
      %v330 = vpop.permute.xlu0 %329
      %331 = vrot.lane.b32.xlu0 %v243, 1
      %v332 = vpop.permute.xlu0 %331
      %333 = vrot.lane.b32.xlu0 %v244, 1
      %v334 = vpop.permute.xlu0 %333
      %v335 = vsub.f32 %v237, %v320
      %v336 = vsub.f32 %v238, %v322
      %v337 = vmul.f32 %v335, %v335
      %v338 = vmul.f32 %v336, %v336
      %v339 = vsub.f32 %v239, %v324
      %v340 = vsub.f32 %v240, %v326
      %v341 = vmul.f32 %v339, %v339
      %v342 = vmul.f32 %v340, %v340
      %v343 = vadd.f32 %v337, %v341
      %v344 = vadd.f32 %v338, %v342
      %v345 = vsub.f32 %v241, %v328
      %v346 = vsub.f32 %v242, %v330
      %v347 = vmul.f32 %v345, %v345
      %v348 = vmul.f32 %v346, %v346
      %v349 = vadd.f32 %v343, %v347
      %v350 = vadd.f32 %v344, %v348
      %v351 = vmul.f32 %v349, 0.5
      %v352 = vmul.f32 %v350, 0.5
      %v353 = vsub.f32 1.0, %v351
      %v354 = vsub.f32 1.0, %v352
      %vm355 = vcmp.gt.f32.partialorder %v353, 0.2
      %vm356 = vcmp.gt.f32.partialorder %v354, 0.2
      %v357 = vsel %vm355, 1.0, 1e-06
      %v358 = vsel %vm356, 1.0, 1e-06
      %v359 = vsub.f32 %v243, %v332
      %v360 = vsub.f32 %v244, %v334
      %v361 = vmul.f32 %v359, %v359
      %v362 = vmul.f32 %v360, %v360
      %v363 = vmul.f32 %v357, %v361
      %v364 = vmul.f32 %v358, %v362
      %v365 = vmul.f32 %v279, %v363
      %v366 = vmul.f32 %v279, %v364
      %v367 = vsub.f32 %v237, %v306
      %v368 = vsub.f32 %v238, %v305
      %v369 = vmul.f32 %v367, %v367
      %v370 = vmul.f32 %v368, %v368
      %v371 = vsub.f32 %v239, %v310
      %v372 = vsub.f32 %v240, %v309
      %v373 = vmul.f32 %v371, %v371
      %v374 = vmul.f32 %v372, %v372
      %v375 = vadd.f32 %v369, %v373
      %v376 = vadd.f32 %v370, %v374
      %v377 = vsub.f32 %v241, %v314
      %v378 = vsub.f32 %v242, %v313
      %v379 = vmul.f32 %v377, %v377
      %v380 = vmul.f32 %v378, %v378
      %v381 = vadd.f32 %v375, %v379
      %v382 = vadd.f32 %v376, %v380
      %v383 = vmul.f32 %v381, 0.5
      %v384 = vmul.f32 %v382, 0.5
      %v385 = vsub.f32 1.0, %v383
      %v386 = vsub.f32 1.0, %v384
      %vm387 = vcmp.gt.f32.partialorder %v385, 0.2
      %vm388 = vcmp.gt.f32.partialorder %v386, 0.2
      %v389 = vsel %vm387, 1.0, 1e-06
      %v390 = vsel %vm388, 1.0, 1e-06
      %v391 = vsub.f32 %v243, %v318
      %v392 = vsub.f32 %v244, %v317
      %v393 = vmul.f32 %v391, %v391
      %v394 = vmul.f32 %v392, %v392
      %v395 = vmul.f32 %v389, %v393
      %v396 = vmul.f32 %v390, %v394
      %v397 = vmul.f32 %v284, %v395
      %v398 = vmul.f32 %v285, %v396
      %v399 = vadd.f32 %v365, %v397
      %v400 = vadd.f32 %v366, %v398
      %401 = vrot.lane.b32.xlu0 %v306, 1
      %v402 = vpop.permute.xlu0 %401
      %403 = vrot.lane.b32.xlu0 %v305, 1
      %v404 = vpop.permute.xlu0 %403
      %405 = vrot.lane.b32.xlu0 %v310, 1
      %v406 = vpop.permute.xlu0 %405
      %407 = vrot.lane.b32.xlu0 %v309, 1
      %v408 = vpop.permute.xlu0 %407
      %409 = vrot.lane.b32.xlu0 %v314, 1
      %v410 = vpop.permute.xlu0 %409
      %411 = vrot.lane.b32.xlu0 %v313, 1
      %v412 = vpop.permute.xlu0 %411
      %413 = vrot.lane.b32.xlu0 %v318, 1
      %v414 = vpop.permute.xlu0 %413
      %415 = vrot.lane.b32.xlu0 %v317, 1
      %v416 = vpop.permute.xlu0 %415
      %v417 = vsub.f32 %v237, %v402
      %v418 = vsub.f32 %v238, %v404
      %v419 = vmul.f32 %v417, %v417
      %v420 = vmul.f32 %v418, %v418
      %v421 = vsub.f32 %v239, %v406
      %v422 = vsub.f32 %v240, %v408
      %v423 = vmul.f32 %v421, %v421
      %v424 = vmul.f32 %v422, %v422
      %v425 = vadd.f32 %v419, %v423
      %v426 = vadd.f32 %v420, %v424
      %v427 = vsub.f32 %v241, %v410
      %v428 = vsub.f32 %v242, %v412
      %v429 = vmul.f32 %v427, %v427
      %v430 = vmul.f32 %v428, %v428
      %v431 = vadd.f32 %v425, %v429
      %v432 = vadd.f32 %v426, %v430
      %v433 = vmul.f32 %v431, 0.5
      %v434 = vmul.f32 %v432, 0.5
      %v435 = vsub.f32 1.0, %v433
      %v436 = vsub.f32 1.0, %v434
      %vm437 = vcmp.gt.f32.partialorder %v435, 0.2
      %vm438 = vcmp.gt.f32.partialorder %v436, 0.2
      %v439 = vsel %vm437, 1.0, 1e-06
      %v440 = vsel %vm438, 1.0, 1e-06
      %v441 = vsub.f32 %v243, %v414
      %v442 = vsub.f32 %v244, %v416
      %v443 = vmul.f32 %v441, %v441
      %v444 = vmul.f32 %v442, %v442
      %v445 = vmul.f32 %v439, %v443
      %v446 = vmul.f32 %v440, %v444
      %v447 = vmul.f32 %v295, %v445
      %v448 = vmul.f32 %v295, %v446
      %v449 = vmul.f32 %v288, %v447
      %v450 = vmul.f32 %v289, %v448
      %v451 = vadd.f32 %v399, %v449
      %v452 = vadd.f32 %v400, %v450
      %v453 = vmul.f32 %v297, %v445
      %v454 = vmul.f32 %v297, %v446
      %v455 = vmul.f32 %v292, %v453
      %v456 = vmul.f32 %v293, %v454
      %v457 = vadd.f32 %v451, %v455
      %v458 = vadd.f32 %v452, %v456
      %459 = vrot.lane.b32.xlu0 %v306, 127
      %v460 = vpop.permute.xlu0 %459
      %461 = vrot.lane.b32.xlu0 %v305, 127
      %v462 = vpop.permute.xlu0 %461
      %463 = vrot.lane.b32.xlu0 %v310, 127
      %v464 = vpop.permute.xlu0 %463
      %465 = vrot.lane.b32.xlu0 %v309, 127
      %v466 = vpop.permute.xlu0 %465
      %467 = vrot.lane.b32.xlu0 %v314, 127
      %v468 = vpop.permute.xlu0 %467
      %469 = vrot.lane.b32.xlu0 %v313, 127
      %v470 = vpop.permute.xlu0 %469
      %471 = vrot.lane.b32.xlu0 %v318, 127
      %v472 = vpop.permute.xlu0 %471
      %473 = vrot.lane.b32.xlu0 %v317, 127
      %v474 = vpop.permute.xlu0 %473
      %v475 = vsub.f32 %v237, %v460
      %v476 = vsub.f32 %v238, %v462
      %v477 = vmul.f32 %v475, %v475
      %v478 = vmul.f32 %v476, %v476
      %v479 = vsub.f32 %v239, %v464
      %v480 = vsub.f32 %v240, %v466
      %v481 = vmul.f32 %v479, %v479
      %v482 = vmul.f32 %v480, %v480
      %v483 = vadd.f32 %v477, %v481
      %v484 = vadd.f32 %v478, %v482
      %v485 = vsub.f32 %v241, %v468
      %v486 = vsub.f32 %v242, %v470
      %v487 = vmul.f32 %v485, %v485
      %v488 = vmul.f32 %v486, %v486
      %v489 = vadd.f32 %v483, %v487
      %v490 = vadd.f32 %v484, %v488
      %v491 = vmul.f32 %v489, 0.5
      %v492 = vmul.f32 %v490, 0.5
      %v493 = vsub.f32 1.0, %v491
      %v494 = vsub.f32 1.0, %v492
      %vm495 = vcmp.gt.f32.partialorder %v493, 0.2
      %vm496 = vcmp.gt.f32.partialorder %v494, 0.2
      %v497 = vsel %vm495, 1.0, 1e-06
      %v498 = vsel %vm496, 1.0, 1e-06
      %v499 = vsub.f32 %v243, %v472
      %v500 = vsub.f32 %v244, %v474
      %v501 = vmul.f32 %v499, %v499
      %v502 = vmul.f32 %v500, %v500
      %v503 = vmul.f32 %v497, %v501
      %v504 = vmul.f32 %v498, %v502
      %v505 = vmul.f32 %v299, %v503
      %v506 = vmul.f32 %v299, %v504
      %v507 = vmul.f32 %v288, %v505
      %v508 = vmul.f32 %v289, %v506
      %v509 = vadd.f32 %v457, %v507
      %v510 = vadd.f32 %v458, %v508
      %v511 = vmul.f32 %v301, %v503
      %v512 = vmul.f32 %v301, %v504
      %v513 = vmul.f32 %v292, %v511
      %v514 = vmul.f32 %v293, %v512
      %v515 = vadd.f32 %v509, %v513
      %v516 = vadd.f32 %v510, %v514
      %vm517 = vcmp.le.s32.totalorder %v252, 15
      %v518 = vsel %vm517, 1.0, 0.0
      %v519 = vmul.f32 %v515, %v518
      %v520 = vmul.f32 %v516, %v518
      %v521 = vadd.f32 %v519, %v520
      %522 = vadd.xlane.f32.xlu0 %v521
      %v523 = vpop.xlane.xlu0 %522
      %v524 = vrot.slane %v523, 4
      %v525 = vadd.f32 %v523, %v524
      %v526 = vrot.slane %v525, 2
      %v527 = vadd.f32 %v525, %v526
      %v528 = vrot.slane %v527, 1
      %v529 = vadd.f32 %v527, %v528
      %s530 = vtos %v529
      %v531 = vstv %s530
      %v532 = vadd.f32 %v531, 0.0
      %533 = vst [vmem:[%s213] sm:$0xff] %v532
      %p534 = scmp.lt.s32.totalorder %s17, 1
      %s535 = scalar_select %p534, %s17, 1
      %p536 = scmp.lt.s32.totalorder %s18, 0
      %s537 = scalar_select %p536, %s18, 0
      %s538 = sadd.s32 %s537, %s535
      %s539 = smul.addr %s538, 8
      %s540 = scalar_lea.vmem %s2, %s539
      // Predicated region
      $region29: #{sempart_feat_reg_loss.1} parent=27 // pred_check
        %p541 = pneg %p101
      $region30: #{sempart_feat_reg_loss.1} parent=27 // pred_check_branch
        %543 = sbr.rel (%p541) target = $region32
      $region31: #{sempart_feat_reg_loss.1} parent=27 // pred_region
        _
      $region32: #{sempart_feat_reg_loss.1} parent=27 // pred_fallthru
        _
    $region28: #{sempart_feat_reg_loss.1} parent=5 // pred_fallthru
      _
    %p544 = scmp.le.s32.totalorder 2, %s8
    // Predicated region
    $region33: #{sempart_feat_reg_loss.1} parent=5 // pred_check
      %p545 = pneg %p544
    $region34: #{sempart_feat_reg_loss.1} parent=5 // pred_check_branch
      %547 = sbr.rel (%p545) target = $region36
    $region35: #{sempart_feat_reg_loss.1} parent=5 // pred_region
      %s548 = ssub.s32 %s8, 2
      // Predicated region
      $region37: #{sempart_feat_reg_loss.1} parent=35 // pred_check
        %p549 = pneg %p107
      $region38: #{sempart_feat_reg_loss.1} parent=35 // pred_check_branch
        %551 = sbr.rel (%p549) target = $region40
      $region39: #{sempart_feat_reg_loss.1} parent=35 // pred_region
        %p552 = scmp.lt.s32.totalorder %s19, 1
        %s553 = scalar_select %p552, %s19, 1
        %p554 = scmp.lt.s32.totalorder %s20, 0
        %s555 = scalar_select %p554, %s20, 0
        %s556 = sadd.s32 %s555, %s553
        %s557 = smul.addr %s556, 8
        %s558 = scalar_lea.vmem %s2, %s557
      $region40: #{sempart_feat_reg_loss.1} parent=35 // pred_fallthru
        _
    $region36: #{sempart_feat_reg_loss.1} parent=5 // pred_fallthru
      _
  $region6: #{sempart_feat_reg_loss.1} parent=0 // loop_footer
    %s12 = sadd.s32 1, %s8
  $region7: #{sempart_feat_reg_loss.1} parent=0 // loop_footer_branch
    %7 = sbr.rel target = $region3
  $region8: #{sempart_feat_reg_loss.1} parent=0 // loop_exit
    _

</llo_original>
